<compile_context>
chip_gen: v5e
topology: v5e:2x2
jax: 0.10.0
libtpu: 0.0.40
codegen_flags: <defaults>
</compile_context>

<pallas_src>
import functools

import jax
import jax.numpy as jnp
from jax.experimental import pallas as pl
from jax.experimental.pallas import tpu as pltpu

_NEG = -1e30  # "-inf" sentinel for the segment max


def _round_up(v, m):
    return (v + m - 1) // m * m


def _cdiv(a, b):
    return (a + b - 1) // b


def _act(h, act_name):
    if act_name == "relu":
        return jnp.maximum(h, 0.0)
    elif act_name == "softplus":
        return jax.nn.softplus(h)
    raise ValueError(f"unsupported act: {act_name}")


# --------------------------------------------------------------------------- #
# Kernel 1: MLP -> lane-dense logits (1, TILE_N) per node tile.               #
# Node axis stays in lanes: h is (dim, TILE_N) so bias/act run on dense vregs. #
# --------------------------------------------------------------------------- #
def mlp_logits_kernel(x_ref, g_ref, w_in_x_ref, w_in_g_ref, b_in_ref,
                      w_hid_ref, b_hid_ref, w_out_ref, b_out_ref,
                      logits_ref, *, n_layers, act_name, compute_dtype):
    # Contract the feature axis of both operands -> (dim, TILE_N), no host-side
    # transpose of x / global_info needed (MXU handles the orientation).
    dims = (((1,), (1,)), ((), ()))
    h = (jax.lax.dot_general(w_in_x_ref[...], x_ref[...], dims,
                             preferred_element_type=jnp.float32)
         + jax.lax.dot_general(w_in_g_ref[...], g_ref[...], dims,
                               preferred_element_type=jnp.float32)
         + b_in_ref[...])
    h = _act(h, act_name)                                   # f32 VPU/EUP math
    for l in range(n_layers):                               # static unroll
        h = jnp.dot(w_hid_ref[l], h.astype(compute_dtype),
                    preferred_element_type=jnp.float32) + b_hid_ref[l]
        h = _act(h, act_name)
    # out_layer: (1, dim) @ (dim, TILE_N) -> lane-dense (1, TILE_N)
    logits_ref[...] = jnp.dot(w_out_ref[...], h.astype(compute_dtype),
                              preferred_element_type=jnp.float32) + b_out_ref[...]


# --------------------------------------------------------------------------- #
# Kernel 2 (fused stats + normalize): 2-phase grid (phase, tile).              #
#   phase 0: online per-graph max / rescaled exp-sum into VMEM scratch.        #
#   phase 1: gather stats per node with one stacked one-hot matmul, normalize. #
# --------------------------------------------------------------------------- #
def segment_softmax_kernel(logits_ref, batch_ref, att_ref, gmax_ref, gsum_ref,
                           *, g_pad, recip_approx):
    phase = pl.program_id(0)
    tile = pl.program_id(1)

    batch = batch_ref[...]                                  # (1, T), -1 = padded lane
    valid = batch >= 0
    logits = jnp.where(valid, logits_ref[...], _NEG)        # mask BEFORE any exp
    t_n = logits.shape[1]
    gids = jax.lax.broadcasted_iota(jnp.int32, (g_pad, t_n), 0)
    mask = batch == gids                                    # (G_pad, T)
    one_hot = mask.astype(jnp.float32)

    @pl.when(phase == 0)
    def _accumulate():
        @pl.when(tile == 0)
        def _init():
            gmax_ref[...] = jnp.full_like(gmax_ref, _NEG)
            gsum_ref[...] = jnp.zeros_like(gsum_ref)

        tile_max = jnp.max(jnp.where(mask, logits, _NEG),
                           axis=1, keepdims=True)           # (G_pad, 1)
        m_old = gmax_ref[...]
        m_new = jnp.maximum(m_old, tile_max)

        # Gather m_new per node on the MXU: (G_pad,1)^T @ (G_pad,T) -> (1,T);
        # exp runs on (1, T) only (not (G_pad, T)).
        node_m = jax.lax.dot_general(m_new, one_hot, (((0,), (0,)), ((), ())),
                                     preferred_element_type=jnp.float32)
        e = jnp.where(valid, jnp.exp(logits - node_m), 0.0)  # (1, T)
        # Segment scatter-add on the MXU: (G_pad,T) . (1,T)^T -> (G_pad,1)
        tile_sum = jax.lax.dot_general(one_hot, e, (((1,), (1,)), ((), ())),
                                       preferred_element_type=jnp.float32)
        gsum_ref[...] = gsum_ref[...] * jnp.exp(m_old - m_new) + tile_sum
        gmax_ref[...] = m_new
        # att block maps to block 0 during phase 0 and is fully overwritten in
        # phase 1 before it is ever flushed, so no store is needed here.

    @pl.when(phase == 1)
    def _normalize():
        stats = jnp.concatenate([gmax_ref[...], gsum_ref[...]], axis=1)  # (G_pad,2)
        node_stats = jax.lax.dot_general(stats, one_hot, (((0,), (0,)), ((), ())),
                                         preferred_element_type=jnp.float32)  # (2,T)
        node_max = node_stats[0:1, :]
        node_sum = node_stats[1:2, :]
        e = jnp.where(valid, jnp.exp(logits - node_max), 0.0)
        att_ref[...] = e * pl.reciprocal(node_sum + 1e-16, approx=recip_approx)


# --------------------------------------------------------------------------- #
# Wrapper                                                                     #
# --------------------------------------------------------------------------- #
def global_attention(x, global_info, batch, params, *, n_layers, num_graphs,
                     act_name="relu", compute_dtype=jnp.bfloat16,
                     max_tile_nodes=2048):
    N, dim = x.shape
    n_glob = global_info.shape[1]
    cdt = jnp.dtype(compute_dtype)

    # ---- adaptive node tiling (multiple of 128; >=2 tiles when enough work) --
    n_tiles_target = max(1, _cdiv(N, max_tile_nodes))
    if N > 256 and n_tiles_target < 2:
        n_tiles_target = 2                       # let v7x megacore engage
    tile_n = _round_up(_cdiv(N, n_tiles_target), 128)
    num_tiles = _cdiv(N, tile_n)
    n_pad = num_tiles * tile_n
    g_pad = _round_up(max(num_graphs, 1), 8)

    # ---- single fused cast(+pad) copy per input (no extra f32 padded copies) -
    x_p = jnp.zeros((n_pad, dim), cdt).at[:N].set(x.astype(cdt))
    g_p = jnp.zeros((n_pad, n_glob), cdt).at[:N].set(global_info.astype(cdt))
    batch_row = jnp.full((1, n_pad), -1, jnp.int32).at[0, :N].set(
        batch.reshape(-1).astype(jnp.int32))

    # ---- params: transposed so the node axis stays in lanes ------------------
    # NOTE: assumes params["w_in"] rows are ordered [x features; global feats],
    # matching the reference torch.cat((x, global_info), -1).
    w_in = params["w_in"].astype(jnp.float32)
    w_in_x_t = w_in[:dim].T.astype(cdt)                     # (dim, dim)
    w_in_g_t = w_in[dim:].T.astype(cdt)                     # (dim, n_glob=107)
    b_in = params["b_in"].reshape(dim, 1).astype(jnp.float32)
    if n_layers > 0:
        w_hid_t = jnp.transpose(params["w_hid"].astype(jnp.float32),
                                (0, 2, 1)).astype(cdt)      # (L, dim, dim)
        b_hid = params["b_hid"].reshape(n_layers, dim, 1).astype(jnp.float32)
        l_blk = n_layers
    else:
        w_hid_t = jnp.zeros((1, dim, dim), cdt)
        b_hid = jnp.zeros((1, dim, 1), jnp.float32)
        l_blk = 1
    w_out_t = params["w_out"].reshape(1, dim).astype(cdt)   # (1, dim) = W_out^T
    b_out = params["b_out"].reshape(1, 1).astype(jnp.float32)

    # ---- pass 1: MLP logits (parallel over node tiles) -----------------------
    mlp = functools.partial(mlp_logits_kernel, n_layers=n_layers,
                            act_name=act_name, compute_dtype=cdt)
    logits = pl.pallas_call(
        mlp,
        out_shape=jax.ShapeDtypeStruct((1, n_pad), jnp.float32),
        grid=(num_tiles,),
        in_specs=[
            pl.BlockSpec((tile_n, dim), lambda i: (i, 0)),        # x tile
            pl.BlockSpec((tile_n, n_glob), lambda i: (i, 0)),     # global tile (full 107)
            pl.BlockSpec((dim, dim), lambda i: (0, 0)),           # W_in_x^T (resident)
            pl.BlockSpec((dim, n_glob), lambda i: (0, 0)),        # W_in_g^T
            pl.BlockSpec((dim, 1), lambda i: (0, 0)),             # b_in
            pl.BlockSpec((l_blk, dim, dim), lambda i: (0, 0, 0)),  # W_hid^T
            pl.BlockSpec((l_blk, dim, 1), lambda i: (0, 0, 0)),    # b_hid
            pl.BlockSpec((1, dim), lambda i: (0, 0)),             # W_out^T
            pl.BlockSpec((1, 1), lambda i: (0, 0)),               # b_out
        ],
        out_specs=pl.BlockSpec((1, tile_n), lambda i: (0, i)),    # lane-dense logits
        compiler_params=pltpu.CompilerParams(
            dimension_semantics=("parallel",),
            vmem_limit_bytes=32 * 1024 * 1024),
    )(x_p, g_p, w_in_x_t, w_in_g_t, b_in, w_hid_t, b_hid, w_out_t, b_out)

    # ---- pass 2 (fused): segment-softmax stats + normalize -------------------
    # Grid (phase, tile); both axes sequential so the VMEM stats persist.
    # Output block index is (0, tile*phase): stays on block 0 during phase 0
    # (never flushed with stale data), then walks the tiles in phase 1.
    recip_approx = bool(cdt == jnp.dtype(jnp.bfloat16))
    seg = functools.partial(segment_softmax_kernel, g_pad=g_pad,
                            recip_approx=recip_approx)
    att = pl.pallas_call(
        seg,
        out_shape=jax.ShapeDtypeStruct((1, n_pad), jnp.float32),
        grid=(2, num_tiles),
        in_specs=[
            pl.BlockSpec((1, tile_n), lambda p, i: (0, i)),       # logits tile
            pl.BlockSpec((1, tile_n), lambda p, i: (0, i)),       # batch ids tile
        ],
        out_specs=pl.BlockSpec((1, tile_n), lambda p, i: (0, i * p)),
        scratch_shapes=[pltpu.VMEM((g_pad, 1), jnp.float32),      # running max
                        pltpu.VMEM((g_pad, 1), jnp.float32)],     # running sum
        compiler_params=pltpu.CompilerParams(
            dimension_semantics=("arbitrary", "arbitrary")),
    )(logits, batch_row)

    return att[0, :N].reshape(N, 1)


# --------------------------------------------------------------------------- #
# Params / reference / demo                                                   #
# --------------------------------------------------------------------------- #
def init_params(key, dim, n_layers):
    k = jax.random.split(key, 6)
    in_dim = dim + 107
    return {
        "w_in":  jax.random.normal(k[0], (in_dim, dim), jnp.float32) * 0.05,
        "b_in":  jax.random.normal(k[1], (1, dim), jnp.float32) * 0.05,
        "w_hid": jax.random.normal(k[2], (n_layers, dim, dim), jnp.float32) * 0.05,
        "b_hid": jax.random.normal(k[3], (n_layers, 1, dim), jnp.float32) * 0.05,
        "w_out": jax.random.normal(k[4], (dim, 1), jnp.float32) * 0.05,
        "b_out": jax.random.normal(k[5], (1, 1), jnp.float32) * 0.05,
    }


def reference(x, global_info, batch, params, *, n_layers, num_graphs, act_name):
    act = (lambda h: jnp.maximum(h, 0.0)) if act_name == "relu" else jax.nn.softplus
    h = jnp.concatenate([x, global_info], axis=-1)
    h = act(h @ params["w_in"] + params["b_in"])
    for l in range(n_layers):
        h = act(h @ params["w_hid"][l] + params["b_hid"][l])
    logits = (h @ params["w_out"] + params["b_out"]).reshape(-1)
    g_max = jax.ops.segment_max(logits, batch, num_segments=num_graphs)
    e = jnp.exp(logits - g_max[batch])
    g_sum = jax.ops.segment_sum(e, batch, num_segments=num_graphs)
    return (e / (g_sum[batch] + 1e-16)).reshape(-1, 1)


if __name__ == "__main__":
    key = jax.random.PRNGKey(0)
    dim = 32
    n_layers = 2
    act_name = "relu"

    N = 300           # total nodes (exercises 2 node tiles + a ragged tail)
    num_graphs = 5    # graphs in the batch
    kx, kg, kb, kp = jax.random.split(key, 4)
    x = jax.random.normal(kx, (N, dim), jnp.float32)
    global_info = jax.random.normal(kg, (N, 107), jnp.float32)
    batch = jnp.sort(jax.random.randint(kb, (N,), 0, num_graphs)).astype(jnp.int32)

    params = init_params(kp, dim, n_layers)

    ref = reference(x, global_info, batch, params,
                    n_layers=n_layers, num_graphs=num_graphs, act_name=act_name)

    # f32-parity path: tight numerical check against the reference.
    out_f32 = global_attention(x, global_info, batch, params,
                               n_layers=n_layers, num_graphs=num_graphs,
                               act_name=act_name, compute_dtype=jnp.float32)
    out_f32 = jax.block_until_ready(out_f32)
    assert out_f32.shape == (N, 1)
    assert jnp.allclose(out_f32, ref, rtol=1e-4, atol=1e-5), (out_f32, ref)

    # Default bf16 matmul path (f32 accumulation): looser tolerance.
    out_bf16 = global_attention(x, global_info, batch, params,
                                n_layers=n_layers, num_graphs=num_graphs,
                                act_name=act_name, compute_dtype=jnp.bfloat16)
    out_bf16 = jax.block_until_ready(out_bf16)
    assert out_bf16.shape == (N, 1)
    assert jnp.allclose(out_bf16, ref, rtol=1e-1, atol=2e-2), (out_bf16, ref)

    print("KERNEL_OK")
</pallas_src>

<mosaic_0001>
module attributes {stable_mosaic.version = 11 : i64} {
  func.func @mlp_logits_kernel(%arg0: i32, %arg1: memref<256x32xf32, #tpu.memory_space<vmem>>, %arg2: memref<256x107xf32, #tpu.memory_space<vmem>>, %arg3: memref<32x32xf32, #tpu.memory_space<vmem>>, %arg4: memref<32x107xf32, #tpu.memory_space<vmem>>, %arg5: memref<32x1xf32, #tpu.memory_space<vmem>>, %arg6: memref<2x32x32xf32, #tpu.memory_space<vmem>>, %arg7: memref<2x32x1xf32, #tpu.memory_space<vmem>>, %arg8: memref<1x32xf32, #tpu.memory_space<vmem>>, %arg9: memref<1x1xf32, #tpu.memory_space<vmem>>, %arg10: memref<1x256xf32, #tpu.memory_space<vmem>>) attributes {dimension_semantics = [#tpu.dimension_semantics<parallel>], iteration_bounds = array<i64: 2>, scalar_prefetch = 0 : i64, scratch_operands = 0 : i64, tpu.core_type = #tpu.core_type<tc>, window_params = [{transform_indices = @transform_0, window_bounds = array<i64: 256, 32>}, {transform_indices = @transform_1, window_bounds = array<i64: 256, 107>}, {pipeline_mode = #tpu.pipeline_mode<synchronous>, transform_indices = @transform_2, window_bounds = array<i64: 32, 32>}, {pipeline_mode = #tpu.pipeline_mode<synchronous>, transform_indices = @transform_3, window_bounds = array<i64: 32, 107>}, {pipeline_mode = #tpu.pipeline_mode<synchronous>, transform_indices = @transform_4, window_bounds = array<i64: 32, 1>}, {pipeline_mode = #tpu.pipeline_mode<synchronous>, transform_indices = @transform_5, window_bounds = array<i64: 2, 32, 32>}, {pipeline_mode = #tpu.pipeline_mode<synchronous>, transform_indices = @transform_6, window_bounds = array<i64: 2, 32, 1>}, {pipeline_mode = #tpu.pipeline_mode<synchronous>, transform_indices = @transform_7, window_bounds = array<i64: 1, 32>}, {pipeline_mode = #tpu.pipeline_mode<synchronous>, transform_indices = @transform_8, window_bounds = array<i64: 1, 1>}, {transform_indices = @transform_9, window_bounds = array<i64: 1, 256>}]} {
    %c0 = arith.constant 0 : index
    %c0_0 = arith.constant 0 : index
    %0 = vector.load %arg3[%c0, %c0_0] : memref<32x32xf32, #tpu.memory_space<vmem>>, vector<32x32xf32>
    %c0_1 = arith.constant 0 : index
    %c0_2 = arith.constant 0 : index
    %1 = vector.load %arg1[%c0_1, %c0_2] : memref<256x32xf32, #tpu.memory_space<vmem>>, vector<256x32xf32>
    %cst = arith.constant dense<0.000000e+00> : vector<32x256xf32>
    %2 = tpu.matmul %0, %1, %cst {dimension_numbers = #tpu.dot_dimension_numbers<[1], [1], [0], [0], [0, 0, 1, 0], [], []>} : vector<32x32xf32>, vector<256x32xf32>, vector<32x256xf32> -> vector<32x256xf32>
    %c0_3 = arith.constant 0 : index
    %c0_4 = arith.constant 0 : index
    %3 = vector.load %arg4[%c0_3, %c0_4] : memref<32x107xf32, #tpu.memory_space<vmem>>, vector<32x107xf32>
    %c0_5 = arith.constant 0 : index
    %c0_6 = arith.constant 0 : index
    %4 = vector.load %arg2[%c0_5, %c0_6] : memref<256x107xf32, #tpu.memory_space<vmem>>, vector<256x107xf32>
    %cst_7 = arith.constant dense<0.000000e+00> : vector<32x256xf32>
    %5 = tpu.matmul %3, %4, %cst_7 {dimension_numbers = #tpu.dot_dimension_numbers<[1], [1], [0], [0], [0, 0, 1, 0], [], []>} : vector<32x107xf32>, vector<256x107xf32>, vector<32x256xf32> -> vector<32x256xf32>
    %6 = arith.addf %2, %5 : vector<32x256xf32>
    %c0_8 = arith.constant 0 : index
    %c0_9 = arith.constant 0 : index
    %7 = vector.load %arg5[%c0_8, %c0_9] : memref<32x1xf32, #tpu.memory_space<vmem>>, vector<32x1xf32>
    %8 = vector.broadcast %7 : vector<32x1xf32> to vector<32x256xf32>
    %9 = arith.addf %6, %8 : vector<32x256xf32>
    %cst_10 = arith.constant 0.000000e+00 : f32
    %10 = vector.broadcast %cst_10 : f32 to vector<32x256xf32>
    %11 = arith.maximumf %9, %10 : vector<32x256xf32>
    %c0_11 = arith.constant 0 : index
    %c0_12 = arith.constant 0 : index
    %c0_13 = arith.constant 0 : index
    %12 = vector.load %arg6[%c0_11, %c0_12, %c0_13] : memref<2x32x32xf32, #tpu.memory_space<vmem>>, vector<1x32x32xf32>
    %13 = vector.shape_cast %12 : vector<1x32x32xf32> to vector<32x32xf32>
    %cst_14 = arith.constant dense<0.000000e+00> : vector<32x256xf32>
    %14 = tpu.matmul %13, %11, %cst_14 {dimension_numbers = #tpu.dot_dimension_numbers<[1], [0], [0], [1], [0, 0, 1, 1], [], []>} : vector<32x32xf32>, vector<32x256xf32>, vector<32x256xf32> -> vector<32x256xf32>
    %c0_15 = arith.constant 0 : index
    %c0_16 = arith.constant 0 : index
    %c0_17 = arith.constant 0 : index
    %15 = vector.load %arg7[%c0_15, %c0_16, %c0_17] : memref<2x32x1xf32, #tpu.memory_space<vmem>>, vector<1x32x1xf32>
    %16 = vector.shape_cast %15 : vector<1x32x1xf32> to vector<32x1xf32>
    %17 = vector.broadcast %16 : vector<32x1xf32> to vector<32x256xf32>
    %18 = arith.addf %14, %17 : vector<32x256xf32>
    %cst_18 = arith.constant 0.000000e+00 : f32
    %19 = vector.broadcast %cst_18 : f32 to vector<32x256xf32>
    %20 = arith.maximumf %18, %19 : vector<32x256xf32>
    %c1 = arith.constant 1 : index
    %c0_19 = arith.constant 0 : index
    %c0_20 = arith.constant 0 : index
    %21 = vector.load %arg6[%c1, %c0_19, %c0_20] : memref<2x32x32xf32, #tpu.memory_space<vmem>>, vector<1x32x32xf32>
    %22 = vector.shape_cast %21 : vector<1x32x32xf32> to vector<32x32xf32>
    %cst_21 = arith.constant dense<0.000000e+00> : vector<32x256xf32>
    %23 = tpu.matmul %22, %20, %cst_21 {dimension_numbers = #tpu.dot_dimension_numbers<[1], [0], [0], [1], [0, 0, 1, 1], [], []>} : vector<32x32xf32>, vector<32x256xf32>, vector<32x256xf32> -> vector<32x256xf32>
    %c1_22 = arith.constant 1 : index
    %c0_23 = arith.constant 0 : index
    %c0_24 = arith.constant 0 : index
    %24 = vector.load %arg7[%c1_22, %c0_23, %c0_24] : memref<2x32x1xf32, #tpu.memory_space<vmem>>, vector<1x32x1xf32>
    %25 = vector.shape_cast %24 : vector<1x32x1xf32> to vector<32x1xf32>
    %26 = vector.broadcast %25 : vector<32x1xf32> to vector<32x256xf32>
    %27 = arith.addf %23, %26 : vector<32x256xf32>
    %cst_25 = arith.constant 0.000000e+00 : f32
    %28 = vector.broadcast %cst_25 : f32 to vector<32x256xf32>
    %29 = arith.maximumf %27, %28 : vector<32x256xf32>
    %c0_26 = arith.constant 0 : index
    %c0_27 = arith.constant 0 : index
    %30 = vector.load %arg8[%c0_26, %c0_27] : memref<1x32xf32, #tpu.memory_space<vmem>>, vector<1x32xf32>
    %cst_28 = arith.constant dense<0.000000e+00> : vector<1x256xf32>
    %31 = tpu.matmul %30, %29, %cst_28 {dimension_numbers = #tpu.dot_dimension_numbers<[1], [0], [0], [1], [0, 0, 1, 1], [], []>} : vector<1x32xf32>, vector<32x256xf32>, vector<1x256xf32> -> vector<1x256xf32>
    %c0_29 = arith.constant 0 : index
    %c0_30 = arith.constant 0 : index
    %32 = vector.load %arg9[%c0_29, %c0_30] : memref<1x1xf32, #tpu.memory_space<vmem>>, vector<1x1xf32>
    %33 = vector.broadcast %32 : vector<1x1xf32> to vector<1x256xf32>
    %34 = arith.addf %31, %33 : vector<1x256xf32>
    %c0_31 = arith.constant 0 : index
    %c0_32 = arith.constant 0 : index
    %35 = vector.load %arg10[%c0_31, %c0_32] : memref<1x256xf32, #tpu.memory_space<vmem>>, vector<1x256xf32>
    tpu.vector_store %arg10[%c0_31, %c0_32], %34 {strides = array<i32>} : memref<1x256xf32, #tpu.memory_space<vmem>>, vector<1x256xf32>,
    return
  }
  func.func @transform_0(%arg0: i32) -> (i32, i32) {
    %c0_i32 = arith.constant 0 : i32
    %c0_i32_0 = arith.constant 0 : i32
    return %arg0, %c0_i32 : i32, i32
  }
  func.func @transform_1(%arg0: i32) -> (i32, i32) {
    %c0_i32 = arith.constant 0 : i32
    %c0_i32_0 = arith.constant 0 : i32
    return %arg0, %c0_i32 : i32, i32
  }
  func.func @transform_2(%arg0: i32) -> (i32, i32) {
    %c0_i32 = arith.constant 0 : i32
    %c0_i32_0 = arith.constant 0 : i32
    %c0_i32_1 = arith.constant 0 : i32
    return %c0_i32, %c0_i32_0 : i32, i32
  }
  func.func @transform_3(%arg0: i32) -> (i32, i32) {
    %c0_i32 = arith.constant 0 : i32
    %c0_i32_0 = arith.constant 0 : i32
    %c0_i32_1 = arith.constant 0 : i32
    return %c0_i32, %c0_i32_0 : i32, i32
  }
  func.func @transform_4(%arg0: i32) -> (i32, i32) {
    %c0_i32 = arith.constant 0 : i32
    %c0_i32_0 = arith.constant 0 : i32
    %c0_i32_1 = arith.constant 0 : i32
    return %c0_i32, %c0_i32_0 : i32, i32
  }
  func.func @transform_5(%arg0: i32) -> (i32, i32, i32) {
    %c0_i32 = arith.constant 0 : i32
    %c0_i32_0 = arith.constant 0 : i32
    %c0_i32_1 = arith.constant 0 : i32
    %c0_i32_2 = arith.constant 0 : i32
    return %c0_i32, %c0_i32_0, %c0_i32_1 : i32, i32, i32
  }
  func.func @transform_6(%arg0: i32) -> (i32, i32, i32) {
    %c0_i32 = arith.constant 0 : i32
    %c0_i32_0 = arith.constant 0 : i32
    %c0_i32_1 = arith.constant 0 : i32
    %c0_i32_2 = arith.constant 0 : i32
    return %c0_i32, %c0_i32_0, %c0_i32_1 : i32, i32, i32
  }
  func.func @transform_7(%arg0: i32) -> (i32, i32) {
    %c0_i32 = arith.constant 0 : i32
    %c0_i32_0 = arith.constant 0 : i32
    %c0_i32_1 = arith.constant 0 : i32
    return %c0_i32, %c0_i32_0 : i32, i32
  }
  func.func @transform_8(%arg0: i32) -> (i32, i32) {
    %c0_i32 = arith.constant 0 : i32
    %c0_i32_0 = arith.constant 0 : i32
    %c0_i32_1 = arith.constant 0 : i32
    return %c0_i32, %c0_i32_0 : i32, i32
  }
  func.func @transform_9(%arg0: i32) -> (i32, i32) {
    %c0_i32 = arith.constant 0 : i32
    %c0_i32_0 = arith.constant 0 : i32
    return %c0_i32, %arg0 : i32, i32
  }
}

</mosaic_0001>

<llo_original>
// kernel: tpu_custom_call.1
$region0: #{tpu_custom_call.1}
  #allocation0 [shape = 'u32[]', space=smem, size = 0x4, offset = 0x4, fixed_abs, tag = 'smem constant byte address 0x4 - core index']
  #allocation1 [shape = 'u32[72,128]{1,0:T(1,128)}', space=vmem, size = 0x9000, scoped, tag = 'internal scratch']
  #allocation2 [shape = 'f32[1,1]{1,0:T(1,128)S(1)}', space=vmem, size = 0x200, scoped, tag = 'scoped memory for tpu_custom_call.1']
  %s0 = inlined_call_operand.vmem [shape: f32[512,32], index: 0, kind: input, shape index: {}]
  %s1 = inlined_call_operand.vmem [shape: f32[512,107], index: 1, kind: input, shape index: {}]
  %s2 = inlined_call_operand.vmem [shape: f32[32,32], index: 2, kind: input, shape index: {}]
  %s3 = inlined_call_operand.vmem [shape: f32[32,107], index: 3, kind: input, shape index: {}]
  %s4 = inlined_call_operand.vmem [shape: f32[32,1], index: 4, kind: input, shape index: {}]
  %s5 = inlined_call_operand.vmem [shape: f32[2,32,32], index: 5, kind: input, shape index: {}]
  %s6 = inlined_call_operand.vmem [shape: f32[2,32,1], index: 6, kind: input, shape index: {}]
  %s7 = inlined_call_operand.vmem [shape: f32[1,32], index: 7, kind: input, shape index: {}]
  %s8 = inlined_call_operand.<no memory space> [shape: f32[1,1], index: 8, kind: input, shape index: {}]
  %s9 = inlined_call_operand.hbm [shape: f32[1,512], index: 9, kind: output, shape index: {}]
  %s10 = sld [smem:[#allocation0]]
  $region69: #{tpu_custom_call.1} parent=0
    _
  %s12 = ssub.s32 1, %s10
  %s13 = scalar_select 0, %s12, %s10
  %v14 = vstv %s8
  %15 = vst [vmem:[#allocation2] sm:$0x1] %v14
  $region1: #{tpu_custom_call.1} parent=0
    #allocation3 [shape = 'u8[2048]{0}', space=vmem, size = 0x800, scoped, tag = 'output window, operand 0']
    #allocation4 [shape = 's32[2]{0}', space=sflag, size = 0x8, scoped, tag = 'scoped memory for tpu_custom_call.1']
    %16 = vsyncpa [#allocation4], 0
    %s17 = scalar_lea.sflag [#allocation4], 1
    %18 = vsyncpa %s17, 0
    loop: start=0, step=1, limit=4
    $region2: #{tpu_custom_call.1} parent=1 // loop_pre_header
      _
    $region3: #{tpu_custom_call.1} parent=1 // loop_header
      %s20 = sphi 0, %s24
      %p21 = scmp.ge.s32.totalorder %s20, 4
      %s30 = sphi 0, %s32
      %s33 = sphi 0, %s30
      %s34 = sphi 0, %s33
      %s50 = sphi 0, %s34
      %s56 = sphi 0, %s58
      %s59 = sphi 0, %s56
      %s60 = sphi 0, %s59
      %s76 = sphi 0, %s60
      %s80 = sphi 0, %s80
      %s82 = sphi 0, %s80
      %s83 = sphi 0, %s82
      %s97 = sphi 0, %s83
      %s101 = sphi 0, %s101
      %s103 = sphi 0, %s101
      %s104 = sphi 0, %s103
      %s118 = sphi 0, %s104
      %s122 = sphi 0, %s122
      %s124 = sphi 0, %s122
      %s125 = sphi 0, %s124
      %s139 = sphi 0, %s125
      %s143 = sphi 0, %s143
      %s145 = sphi 0, %s143
      %s146 = sphi 0, %s145
      %s160 = sphi 0, %s146
      %s164 = sphi 0, %s164
      %s166 = sphi 0, %s164
      %s167 = sphi 0, %s166
      %s181 = sphi 0, %s167
      %s185 = sphi 0, %s185
      %s187 = sphi 0, %s185
      %s188 = sphi 0, %s187
      %s202 = sphi 0, %s188
      %s206 = sphi 0, %s206
      %s208 = sphi 0, %s206
      %s209 = sphi 0, %s208
      %s223 = sphi 0, %s209
      %s229 = sphi 0, %s231
      %s232 = sphi 0, %s229
      %s233 = sphi 0, %s232
      %s249 = sphi 0, %s233
    $region4: #{tpu_custom_call.1} parent=1 // loop_header_branch
      %23 = sbr.rel (%p21) target = $region8
    $region5: #{tpu_custom_call.1} parent=1 // loop_body
      %s25 = ssub.s32 %s20, 1
      %s26 = ssub.s32 %s20, 2
      %s27 = sadd.s32 %s20, 1
      %s28 = ssub.s32 %s20, %s27
      %p29 = scmp.eq.s32.totalorder %s28, 0
      %s31 = sadd.s32 %s30, 1
      %s32 = scalar_select %p29, %s30, %s31
      %p35 = pneg %p29
      %p36 = scmp.eq.s32.totalorder %s20, 1
      %p37 = por %p35, %p36
      %p38 = scmp.ne.s32.totalorder %s30, %s33
      %p39 = scmp.eq.s32.totalorder %s20, 0
      %p40 = por %p38, %p39
      %p41 = scmp.ne.s32.totalorder %s30, %s33
      %p42 = scmp.eq.s32.totalorder %s25, 1
      %p43 = por %p41, %p42
      %p44 = scmp.ne.s32.totalorder %s33, %s34
      %p45 = scmp.eq.s32.totalorder %s25, 0
      %p46 = por %p44, %p45
      %p47 = scmp.ne.s32.totalorder %s33, %s34
      %p48 = scmp.eq.s32.totalorder %s26, 1
      %p49 = por %p47, %p48
      %p51 = scmp.ne.s32.totalorder %s34, %s50
      %p52 = scmp.eq.s32.totalorder %s26, 0
      %p53 = por %p51, %p52
      %s54 = ssub.s32 %s20, %s27
      %p55 = scmp.eq.s32.totalorder %s54, 0
      %s57 = sadd.s32 %s56, 1
      %s58 = scalar_select %p55, %s56, %s57
      %p61 = pneg %p55
      %p62 = scmp.eq.s32.totalorder %s20, 1
      %p63 = por %p61, %p62
      %p64 = scmp.ne.s32.totalorder %s56, %s59
      %p65 = scmp.eq.s32.totalorder %s20, 0
      %p66 = por %p64, %p65
      %p67 = scmp.ne.s32.totalorder %s56, %s59
      %p68 = scmp.eq.s32.totalorder %s25, 1
      %p69 = por %p67, %p68
      %p70 = scmp.ne.s32.totalorder %s59, %s60
      %p71 = scmp.eq.s32.totalorder %s25, 0
      %p72 = por %p70, %p71
      %p73 = scmp.ne.s32.totalorder %s59, %s60
      %p74 = scmp.eq.s32.totalorder %s26, 1
      %p75 = por %p73, %p74
      %p77 = scmp.ne.s32.totalorder %s60, %s76
      %p78 = scmp.eq.s32.totalorder %s26, 0
      %p79 = por %p77, %p78
      %s81 = sadd.s32 %s80, 1
      %p84 = scmp.eq.s32.totalorder %s20, 1
      %p85 = scmp.ne.s32.totalorder %s80, %s82
      %p86 = scmp.eq.s32.totalorder %s20, 0
      %p87 = por %p85, %p86
      %p88 = scmp.ne.s32.totalorder %s80, %s82
      %p89 = scmp.eq.s32.totalorder %s25, 1
      %p90 = por %p88, %p89
      %p91 = scmp.ne.s32.totalorder %s82, %s83
      %p92 = scmp.eq.s32.totalorder %s25, 0
      %p93 = por %p91, %p92
      %p94 = scmp.ne.s32.totalorder %s82, %s83
      %p95 = scmp.eq.s32.totalorder %s26, 1
      %p96 = por %p94, %p95
      %p98 = scmp.ne.s32.totalorder %s83, %s97
      %p99 = scmp.eq.s32.totalorder %s26, 0
      %p100 = por %p98, %p99
      %s102 = sadd.s32 %s101, 1
      %p105 = scmp.eq.s32.totalorder %s20, 1
      %p106 = scmp.ne.s32.totalorder %s101, %s103
      %p107 = scmp.eq.s32.totalorder %s20, 0
      %p108 = por %p106, %p107
      %p109 = scmp.ne.s32.totalorder %s101, %s103
      %p110 = scmp.eq.s32.totalorder %s25, 1
      %p111 = por %p109, %p110
      %p112 = scmp.ne.s32.totalorder %s103, %s104
      %p113 = scmp.eq.s32.totalorder %s25, 0
      %p114 = por %p112, %p113
      %p115 = scmp.ne.s32.totalorder %s103, %s104
      %p116 = scmp.eq.s32.totalorder %s26, 1
      %p117 = por %p115, %p116
      %p119 = scmp.ne.s32.totalorder %s104, %s118
      %p120 = scmp.eq.s32.totalorder %s26, 0
      %p121 = por %p119, %p120
      %s123 = sadd.s32 %s122, 1
      %p126 = scmp.eq.s32.totalorder %s20, 1
      %p127 = scmp.ne.s32.totalorder %s122, %s124
      %p128 = scmp.eq.s32.totalorder %s20, 0
      %p129 = por %p127, %p128
      %p130 = scmp.ne.s32.totalorder %s122, %s124
      %p131 = scmp.eq.s32.totalorder %s25, 1
      %p132 = por %p130, %p131
      %p133 = scmp.ne.s32.totalorder %s124, %s125
      %p134 = scmp.eq.s32.totalorder %s25, 0
      %p135 = por %p133, %p134
      %p136 = scmp.ne.s32.totalorder %s124, %s125
      %p137 = scmp.eq.s32.totalorder %s26, 1
      %p138 = por %p136, %p137
      %p140 = scmp.ne.s32.totalorder %s125, %s139
      %p141 = scmp.eq.s32.totalorder %s26, 0
      %p142 = por %p140, %p141
      %s144 = sadd.s32 %s143, 1
      %p147 = scmp.eq.s32.totalorder %s20, 1
      %p148 = scmp.ne.s32.totalorder %s143, %s145
      %p149 = scmp.eq.s32.totalorder %s20, 0
      %p150 = por %p148, %p149
      %p151 = scmp.ne.s32.totalorder %s143, %s145
      %p152 = scmp.eq.s32.totalorder %s25, 1
      %p153 = por %p151, %p152
      %p154 = scmp.ne.s32.totalorder %s145, %s146
      %p155 = scmp.eq.s32.totalorder %s25, 0
      %p156 = por %p154, %p155
      %p157 = scmp.ne.s32.totalorder %s145, %s146
      %p158 = scmp.eq.s32.totalorder %s26, 1
      %p159 = por %p157, %p158
      %p161 = scmp.ne.s32.totalorder %s146, %s160
      %p162 = scmp.eq.s32.totalorder %s26, 0
      %p163 = por %p161, %p162
      %s165 = sadd.s32 %s164, 1
      %p168 = scmp.eq.s32.totalorder %s20, 1
      %p169 = scmp.ne.s32.totalorder %s164, %s166
      %p170 = scmp.eq.s32.totalorder %s20, 0
      %p171 = por %p169, %p170
      %p172 = scmp.ne.s32.totalorder %s164, %s166
      %p173 = scmp.eq.s32.totalorder %s25, 1
      %p174 = por %p172, %p173
      %p175 = scmp.ne.s32.totalorder %s166, %s167
      %p176 = scmp.eq.s32.totalorder %s25, 0
      %p177 = por %p175, %p176
      %p178 = scmp.ne.s32.totalorder %s166, %s167
      %p179 = scmp.eq.s32.totalorder %s26, 1
      %p180 = por %p178, %p179
      %p182 = scmp.ne.s32.totalorder %s167, %s181
      %p183 = scmp.eq.s32.totalorder %s26, 0
      %p184 = por %p182, %p183
      %s186 = sadd.s32 %s185, 1
      %p189 = scmp.eq.s32.totalorder %s20, 1
      %p190 = scmp.ne.s32.totalorder %s185, %s187
      %p191 = scmp.eq.s32.totalorder %s20, 0
      %p192 = por %p190, %p191
      %p193 = scmp.ne.s32.totalorder %s185, %s187
      %p194 = scmp.eq.s32.totalorder %s25, 1
      %p195 = por %p193, %p194
      %p196 = scmp.ne.s32.totalorder %s187, %s188
      %p197 = scmp.eq.s32.totalorder %s25, 0
      %p198 = por %p196, %p197
      %p199 = scmp.ne.s32.totalorder %s187, %s188
      %p200 = scmp.eq.s32.totalorder %s26, 1
      %p201 = por %p199, %p200
      %p203 = scmp.ne.s32.totalorder %s188, %s202
      %p204 = scmp.eq.s32.totalorder %s26, 0
      %p205 = por %p203, %p204
      %s207 = sadd.s32 %s206, 1
      %p210 = scmp.eq.s32.totalorder %s20, 1
      %p211 = scmp.ne.s32.totalorder %s206, %s208
      %p212 = scmp.eq.s32.totalorder %s20, 0
      %p213 = por %p211, %p212
      %p214 = scmp.ne.s32.totalorder %s206, %s208
      %p215 = scmp.eq.s32.totalorder %s25, 1
      %p216 = por %p214, %p215
      %p217 = scmp.ne.s32.totalorder %s208, %s209
      %p218 = scmp.eq.s32.totalorder %s25, 0
      %p219 = por %p217, %p218
      %p220 = scmp.ne.s32.totalorder %s208, %s209
      %p221 = scmp.eq.s32.totalorder %s26, 1
      %p222 = por %p220, %p221
      %p224 = scmp.ne.s32.totalorder %s209, %s223
      %p225 = scmp.eq.s32.totalorder %s26, 0
      %p226 = por %p224, %p225
      %s227 = ssub.s32 %s20, %s27
      %p228 = scmp.eq.s32.totalorder %s227, 0
      %s230 = sadd.s32 %s229, 1
      %s231 = scalar_select %p228, %s229, %s230
      %p234 = pneg %p228
      %p235 = scmp.eq.s32.totalorder %s20, 1
      %p236 = por %p234, %p235
      %p237 = scmp.ne.s32.totalorder %s229, %s232
      %p238 = scmp.eq.s32.totalorder %s20, 0
      %p239 = por %p237, %p238
      %p240 = scmp.ne.s32.totalorder %s229, %s232
      %p241 = scmp.eq.s32.totalorder %s25, 1
      %p242 = por %p240, %p241
      %p243 = scmp.ne.s32.totalorder %s232, %s233
      %p244 = scmp.eq.s32.totalorder %s25, 0
      %p245 = por %p243, %p244
      %p246 = scmp.ne.s32.totalorder %s232, %s233
      %p247 = scmp.eq.s32.totalorder %s26, 1
      %p248 = por %p246, %p247
      %p250 = scmp.ne.s32.totalorder %s233, %s249
      %p251 = scmp.eq.s32.totalorder %s26, 0
      %p252 = por %p250, %p251
      %p253 = scmp.le.s32.totalorder 1, %s20
      %p254 = scmp.lt.s32.totalorder %s20, 3
      %p255 = pnand %p253, %p254
      %p256 = pneg %p255
      // Predicated region
      $region9: #{tpu_custom_call.1} parent=5 // pred_check
        _
      $region10: #{tpu_custom_call.1} parent=5 // pred_check_branch
        %258 = sbr.rel (%p255) target = $region12
      $region11: #{tpu_custom_call.1} parent=5 // pred_region
        %s259 = ssub.s32 %s20, 1
        // Predicated region
        $region13: #{tpu_custom_call.1} parent=11 // pred_check
          %p260 = pneg %p93
        $region14: #{tpu_custom_call.1} parent=11 // pred_check_branch
          %262 = sbr.rel (%p260) target = $region16
        $region15: #{tpu_custom_call.1} parent=11 // pred_region
          _
        $region16: #{tpu_custom_call.1} parent=11 // pred_fallthru
          _
        // Predicated region
        $region17: #{tpu_custom_call.1} parent=11 // pred_check
          %p263 = pneg %p114
        $region18: #{tpu_custom_call.1} parent=11 // pred_check_branch
          %265 = sbr.rel (%p263) target = $region20
        $region19: #{tpu_custom_call.1} parent=11 // pred_region
          _
        $region20: #{tpu_custom_call.1} parent=11 // pred_fallthru
          _
        // Predicated region
        $region21: #{tpu_custom_call.1} parent=11 // pred_check
          %p266 = pneg %p135
        $region22: #{tpu_custom_call.1} parent=11 // pred_check_branch
          %268 = sbr.rel (%p266) target = $region24
        $region23: #{tpu_custom_call.1} parent=11 // pred_region
          _
        $region24: #{tpu_custom_call.1} parent=11 // pred_fallthru
          _
        // Predicated region
        $region25: #{tpu_custom_call.1} parent=11 // pred_check
          %p269 = pneg %p156
        $region26: #{tpu_custom_call.1} parent=11 // pred_check_branch
          %271 = sbr.rel (%p269) target = $region28
        $region27: #{tpu_custom_call.1} parent=11 // pred_region
          _
        $region28: #{tpu_custom_call.1} parent=11 // pred_fallthru
          _
        // Predicated region
        $region29: #{tpu_custom_call.1} parent=11 // pred_check
          %p272 = pneg %p177
        $region30: #{tpu_custom_call.1} parent=11 // pred_check_branch
          %274 = sbr.rel (%p272) target = $region32
        $region31: #{tpu_custom_call.1} parent=11 // pred_region
          _
        $region32: #{tpu_custom_call.1} parent=11 // pred_fallthru
          _
        // Predicated region
        $region33: #{tpu_custom_call.1} parent=11 // pred_check
          %p275 = pneg %p198
        $region34: #{tpu_custom_call.1} parent=11 // pred_check_branch
          %277 = sbr.rel (%p275) target = $region36
        $region35: #{tpu_custom_call.1} parent=11 // pred_region
          _
        $region36: #{tpu_custom_call.1} parent=11 // pred_fallthru
          _
        // Predicated region
        $region37: #{tpu_custom_call.1} parent=11 // pred_check
          %p278 = pneg %p219
        $region38: #{tpu_custom_call.1} parent=11 // pred_check_branch
          %280 = sbr.rel (%p278) target = $region40
        $region39: #{tpu_custom_call.1} parent=11 // pred_region
          _
        $region40: #{tpu_custom_call.1} parent=11 // pred_fallthru
          _
      $region12: #{tpu_custom_call.1} parent=5 // pred_fallthru
        _
      %p281 = scmp.lt.s32.totalorder %s20, 2
      // Predicated region
      $region41: #{tpu_custom_call.1} parent=5 // pred_check
        %p282 = pneg %p281
      $region42: #{tpu_custom_call.1} parent=5 // pred_check_branch
        %284 = sbr.rel (%p282) target = $region44
      $region43: #{tpu_custom_call.1} parent=5 // pred_region
        // Predicated region
        $region45: #{tpu_custom_call.1} parent=43 // pred_check
          %p285 = pneg %p40
        $region46: #{tpu_custom_call.1} parent=43 // pred_check_branch
          %287 = sbr.rel (%p285) target = $region48
        $region47: #{tpu_custom_call.1} parent=43 // pred_region
          %s288 = smul.u32 32, %s20
          %p289 = scmp.lt.s32.totalorder %s288, 63
          %s290 = scalar_select %p289, %s288, 63
          %s291 = smul.addr %s290, 8
          %s292 = scalar_lea.vmem %s0, %s291
          %s293 = smul.u32 32, %s20
        $region48: #{tpu_custom_call.1} parent=43 // pred_fallthru
          _
        // Predicated region
        $region49: #{tpu_custom_call.1} parent=43 // pred_check
          %p294 = pneg %p66
        $region50: #{tpu_custom_call.1} parent=43 // pred_check_branch
          %296 = sbr.rel (%p294) target = $region52
        $region51: #{tpu_custom_call.1} parent=43 // pred_region
          %s297 = smul.u32 32, %s20
          %p298 = scmp.lt.s32.totalorder %s297, 63
          %s299 = scalar_select %p298, %s297, 63
          %s300 = smul.addr %s299, 8
          %s301 = scalar_lea.vmem %s1, %s300
          %s302 = smul.u32 32, %s20
        $region52: #{tpu_custom_call.1} parent=43 // pred_fallthru
          _
      $region44: #{tpu_custom_call.1} parent=5 // pred_fallthru
        _
      %p303 = scmp.le.s32.totalorder 1, %s20
      %p304 = scmp.lt.s32.totalorder %s20, 3
      %p305 = pnand %p303, %p304
      %p306 = pneg %p305
      // Predicated region
      $region53: #{tpu_custom_call.1} parent=5 // pred_check
        _
      $region54: #{tpu_custom_call.1} parent=5 // pred_check_branch
        %308 = sbr.rel (%p305) target = $region56
      $region55: #{tpu_custom_call.1} parent=5 // pred_region
        %s309 = ssub.s32 %s20, 1
        %s310 = smul.u32 32, %s25
        %p311 = scmp.lt.s32.totalorder %s310, 63
        %s312 = scalar_select %p311, %s310, 63
        %s313 = smul.addr %s312, 8
        %s314 = scalar_lea.vmem %s0, %s313
        %p315 = pneg %p46
        %p316 = pneg %p43
        %s317 = smul.u32 32, %s25
        %p318 = scmp.lt.s32.totalorder %s317, 63
        %s319 = scalar_select %p318, %s317, 63
        %s320 = smul.addr %s319, 8
        %s321 = scalar_lea.vmem %s1, %s320
        %p322 = pneg %p72
        %p323 = pneg %p69
        %p324 = pneg %p93
        %p325 = pneg %p90
        %p326 = pneg %p114
        %p327 = pneg %p111
        %p328 = pneg %p135
        %p329 = pneg %p132
        %p330 = pneg %p156
        %p331 = pneg %p153
        %p332 = pneg %p177
        %p333 = pneg %p174
        %p334 = pneg %p198
        %p335 = pneg %p195
        %p336 = pneg %p219
        %p337 = pneg %p216
        %p338 = pneg %p245
        %p339 = pneg %p242
        %s340 = sand.u32 %s232, 1
        %s341 = scalar_lea.sflag [#allocation4], %s340
        %s342 = sand.u32 %s232, 1
        %s343 = smul.addr %s342, 2
        %s344 = scalar_lea.vmem [#allocation3], %s343
        %s345 = smul.u32 32, %s25
        %p346 = scmp.lt.s32.totalorder %s345, 63
        %s347 = scalar_select %p346, %s345, 63
        %s348 = smul.addr %s347, 8
        %s349 = scalar_lea.vmem %s0, %s348
        %s350 = smul.u32 32, %s25
        %s351 = smul.u32 32, %s25
        %p352 = scmp.lt.s32.totalorder %s351, 63
        %s353 = scalar_select %p352, %s351, 63
        %s354 = smul.addr %s353, 8
        %s355 = scalar_lea.vmem %s1, %s354
        %s356 = smul.u32 32, %s25
        %s357 = smul.u32 2, %s25
        %v358 = vld [vmem:[%s2] sm:$0xff]
        %v359 = vld [vmem:[%s2 + $0x8] sm:$0xff]
        %v360 = vld [vmem:[%s2 + $0x10] sm:$0xff]
        %v361 = vld [vmem:[%s2 + $0x18] sm:$0xff]
        %v362 = vld [vmem:[%s349] sm:$0xff]
        %v363 = vld [vmem:[%s349 + $0x8] sm:$0xff]
        %v364 = vld [vmem:[%s349 + $0x10] sm:$0xff]
        %v365 = vld [vmem:[%s349 + $0x18] sm:$0xff]
        %v366 = vld [vmem:[%s349 + $0x20] sm:$0xff]
        %v367 = vld [vmem:[%s349 + $0x28] sm:$0xff]
        %v368 = vld [vmem:[%s349 + $0x30] sm:$0xff]
        %v369 = vld [vmem:[%s349 + $0x38] sm:$0xff]
        %v370 = vld [vmem:[%s349 + $0x40] sm:$0xff]
        %v371 = vld [vmem:[%s349 + $0x48] sm:$0xff]
        %v372 = vld [vmem:[%s349 + $0x50] sm:$0xff]
        %v373 = vld [vmem:[%s349 + $0x58] sm:$0xff]
        %v374 = vld [vmem:[%s349 + $0x60] sm:$0xff]
        %v375 = vld [vmem:[%s349 + $0x68] sm:$0xff]
        %v376 = vld [vmem:[%s349 + $0x70] sm:$0xff]
        %v377 = vld [vmem:[%s349 + $0x78] sm:$0xff]
        %v378 = vld [vmem:[%s349 + $0x80] sm:$0xff]
        %v379 = vld [vmem:[%s349 + $0x88] sm:$0xff]
        %v380 = vld [vmem:[%s349 + $0x90] sm:$0xff]
        %v381 = vld [vmem:[%s349 + $0x98] sm:$0xff]
        %v382 = vld [vmem:[%s349 + $0xa0] sm:$0xff]
        %v383 = vld [vmem:[%s349 + $0xa8] sm:$0xff]
        %v384 = vld [vmem:[%s349 + $0xb0] sm:$0xff]
        %v385 = vld [vmem:[%s349 + $0xb8] sm:$0xff]
        %v386 = vld [vmem:[%s349 + $0xc0] sm:$0xff]
        %v387 = vld [vmem:[%s349 + $0xc8] sm:$0xff]
        %v388 = vld [vmem:[%s349 + $0xd0] sm:$0xff]
        %v389 = vld [vmem:[%s349 + $0xd8] sm:$0xff]
        %v390 = vld [vmem:[%s349 + $0xe0] sm:$0xff]
        %v391 = vld [vmem:[%s349 + $0xe8] sm:$0xff]
        %v392 = vld [vmem:[%s349 + $0xf0] sm:$0xff]
        %v393 = vld [vmem:[%s349 + $0xf8] sm:$0xff]
        %v394 = vld [vmem:[%s3] sm:$0xff]
        %v395 = vld [vmem:[%s3 + $0x8] sm:$0xff]
        %v396 = vld [vmem:[%s3 + $0x10] sm:$0xff]
        %v397 = vld [vmem:[%s3 + $0x18] sm:$0xff]
        %v398 = vld [vmem:[%s355] sm:$0xff]
        %v399 = vld [vmem:[%s355 + $0x8] sm:$0xff]
        %v400 = vld [vmem:[%s355 + $0x10] sm:$0xff]
        %v401 = vld [vmem:[%s355 + $0x18] sm:$0xff]
        %v402 = vld [vmem:[%s355 + $0x20] sm:$0xff]
        %v403 = vld [vmem:[%s355 + $0x28] sm:$0xff]
        %v404 = vld [vmem:[%s355 + $0x30] sm:$0xff]
        %v405 = vld [vmem:[%s355 + $0x38] sm:$0xff]
        %v406 = vld [vmem:[%s355 + $0x40] sm:$0xff]
        %v407 = vld [vmem:[%s355 + $0x48] sm:$0xff]
        %v408 = vld [vmem:[%s355 + $0x50] sm:$0xff]
        %v409 = vld [vmem:[%s355 + $0x58] sm:$0xff]
        %v410 = vld [vmem:[%s355 + $0x60] sm:$0xff]
        %v411 = vld [vmem:[%s355 + $0x68] sm:$0xff]
        %v412 = vld [vmem:[%s355 + $0x70] sm:$0xff]
        %v413 = vld [vmem:[%s355 + $0x78] sm:$0xff]
        %v414 = vld [vmem:[%s355 + $0x80] sm:$0xff]
        %v415 = vld [vmem:[%s355 + $0x88] sm:$0xff]
        %v416 = vld [vmem:[%s355 + $0x90] sm:$0xff]
        %v417 = vld [vmem:[%s355 + $0x98] sm:$0xff]
        %v418 = vld [vmem:[%s355 + $0xa0] sm:$0xff]
        %v419 = vld [vmem:[%s355 + $0xa8] sm:$0xff]
        %v420 = vld [vmem:[%s355 + $0xb0] sm:$0xff]
        %v421 = vld [vmem:[%s355 + $0xb8] sm:$0xff]
        %v422 = vld [vmem:[%s355 + $0xc0] sm:$0xff]
        %v423 = vld [vmem:[%s355 + $0xc8] sm:$0xff]
        %v424 = vld [vmem:[%s355 + $0xd0] sm:$0xff]
        %v425 = vld [vmem:[%s355 + $0xd8] sm:$0xff]
        %v426 = vld [vmem:[%s355 + $0xe0] sm:$0xff]
        %v427 = vld [vmem:[%s355 + $0xe8] sm:$0xff]
        %v428 = vld [vmem:[%s355 + $0xf0] sm:$0xff]
        %v429 = vld [vmem:[%s355 + $0xf8] sm:$0xff]
        %vm430 = vcmask 875520
        %v432 = vsel %vm430, %v394, 0
        %v435 = vsel %vm430, %v395, 0
        %v438 = vsel %vm430, %v396, 0
        %v441 = vsel %vm430, %v397, 0
        %v444 = vsel %vm430, %v398, 0
        %v447 = vsel %vm430, %v399, 0
        %v450 = vsel %vm430, %v400, 0
        %v453 = vsel %vm430, %v401, 0
        %v456 = vsel %vm430, %v402, 0
        %v459 = vsel %vm430, %v403, 0
        %v462 = vsel %vm430, %v404, 0
        %v465 = vsel %vm430, %v405, 0
        %v468 = vsel %vm430, %v406, 0
        %v471 = vsel %vm430, %v407, 0
        %v474 = vsel %vm430, %v408, 0
        %v477 = vsel %vm430, %v409, 0
        %v480 = vsel %vm430, %v410, 0
        %v483 = vsel %vm430, %v411, 0
        %v486 = vsel %vm430, %v412, 0
        %v489 = vsel %vm430, %v413, 0
        %v492 = vsel %vm430, %v414, 0
        %v495 = vsel %vm430, %v415, 0
        %v498 = vsel %vm430, %v416, 0
        %v501 = vsel %vm430, %v417, 0
        %v504 = vsel %vm430, %v418, 0
        %v507 = vsel %vm430, %v419, 0
        %v510 = vsel %vm430, %v420, 0
        %v513 = vsel %vm430, %v421, 0
        %v516 = vsel %vm430, %v422, 0
        %v519 = vsel %vm430, %v423, 0
        %v522 = vsel %vm430, %v424, 0
        %v525 = vsel %vm430, %v425, 0
        %v528 = vsel %vm430, %v426, 0
        %v531 = vsel %vm430, %v427, 0
        %v534 = vsel %vm430, %v428, 0
        %v537 = vsel %vm430, %v429, 0
        %539 = vmatpush.xpose.msra.mxu0 %v489
        %540 = vmatpush.xpose.msra.mxu0 %v486
        %541 = vmatpush.xpose.msra.mxu0 %v483
        %542 = vmatpush.xpose.msra.mxu0 %v480
        %543 = vmatpush.xpose.msra.mxu0 %v477
        %544 = vmatpush.xpose.msra.mxu0 %v474
        %545 = vmatpush.xpose.msra.mxu0 %v471
        %546 = vmatpush.xpose.msra.mxu0 %v468
        %547 = vmatpush.xpose.msra.mxu0 %v465
        %548 = vmatpush.xpose.msra.mxu0 %v462
        %549 = vmatpush.xpose.msra.mxu0 %v459
        %550 = vmatpush.xpose.msra.mxu0 %v456
        %551 = vmatpush.xpose.msra.mxu0 %v453
        %552 = vmatpush.xpose.msra.mxu0 %v450
        %553 = vmatpush.xpose.msra.mxu0 %v447
        %554 = vmatpush.xpose.msra.mxu0 %v444
        %555 = vmatmul.f32.gmra.mxu0 %v432
        %v556 = vpop.f32.mrf.mxu0
        %v557 = vadd.f32 0.0, %v556
        %558 = vmatmul.f32.gmra.mxu0 %v435
        %v559 = vpop.f32.mrf.mxu0
        %v560 = vadd.f32 0.0, %v559
        %561 = vmatmul.f32.gmra.mxu0 %v438
        %v562 = vpop.f32.mrf.mxu0
        %v563 = vadd.f32 0.0, %v562
        %564 = vmatmul.f32.gmra.mxu0 %v441
        %v565 = vpop.f32.mrf.mxu0
        %v566 = vadd.f32 0.0, %v565
        %567 = vdwg.mxu0
        %568 = vmatpush.xpose.msra.mxu0 %v537
        %569 = vmatpush.xpose.msra.mxu0 %v534
        %570 = vmatpush.xpose.msra.mxu0 %v531
        %571 = vmatpush.xpose.msra.mxu0 %v528
        %572 = vmatpush.xpose.msra.mxu0 %v525
        %573 = vmatpush.xpose.msra.mxu0 %v522
        %574 = vmatpush.xpose.msra.mxu0 %v519
        %575 = vmatpush.xpose.msra.mxu0 %v516
        %576 = vmatpush.xpose.msra.mxu0 %v513
        %577 = vmatpush.xpose.msra.mxu0 %v510
        %578 = vmatpush.xpose.msra.mxu0 %v507
        %579 = vmatpush.xpose.msra.mxu0 %v504
        %580 = vmatpush.xpose.msra.mxu0 %v501
        %581 = vmatpush.xpose.msra.mxu0 %v498
        %582 = vmatpush.xpose.msra.mxu0 %v495
        %583 = vmatpush.xpose.msra.mxu0 %v492
        %584 = vmatmul.f32.gmra.mxu0 %v432
        %v585 = vpop.f32.mrf.mxu0
        %v586 = vadd.f32 0.0, %v585
        %587 = vmatmul.f32.gmra.mxu0 %v435
        %v588 = vpop.f32.mrf.mxu0
        %v589 = vadd.f32 0.0, %v588
        %590 = vmatmul.f32.gmra.mxu0 %v438
        %v591 = vpop.f32.mrf.mxu0
        %v592 = vadd.f32 0.0, %v591
        %593 = vmatmul.f32.gmra.mxu0 %v441
        %v594 = vpop.f32.mrf.mxu0
        %v595 = vadd.f32 0.0, %v594
        %596 = vdwg.mxu0
        %vm597 = vcmask 261120
        %v599 = vsel %vm597, %v358, 0
        %v602 = vsel %vm597, %v359, 0
        %v605 = vsel %vm597, %v360, 0
        %v608 = vsel %vm597, %v361, 0
        %v611 = vsel %vm597, %v362, 0
        %v614 = vsel %vm597, %v363, 0
        %v617 = vsel %vm597, %v364, 0
        %v620 = vsel %vm597, %v365, 0
        %v623 = vsel %vm597, %v366, 0
        %v626 = vsel %vm597, %v367, 0
        %v629 = vsel %vm597, %v368, 0
        %v632 = vsel %vm597, %v369, 0
        %v635 = vsel %vm597, %v370, 0
        %v638 = vsel %vm597, %v371, 0
        %v641 = vsel %vm597, %v372, 0
        %v644 = vsel %vm597, %v373, 0
        %v647 = vsel %vm597, %v374, 0
        %v650 = vsel %vm597, %v375, 0
        %v653 = vsel %vm597, %v376, 0
        %v656 = vsel %vm597, %v377, 0
        %v659 = vsel %vm597, %v378, 0
        %v662 = vsel %vm597, %v379, 0
        %v665 = vsel %vm597, %v380, 0
        %v668 = vsel %vm597, %v381, 0
        %v671 = vsel %vm597, %v382, 0
        %v674 = vsel %vm597, %v383, 0
        %v677 = vsel %vm597, %v384, 0
        %v680 = vsel %vm597, %v385, 0
        %v683 = vsel %vm597, %v386, 0
        %v686 = vsel %vm597, %v387, 0
        %v689 = vsel %vm597, %v388, 0
        %v692 = vsel %vm597, %v389, 0
        %v695 = vsel %vm597, %v390, 0
        %v698 = vsel %vm597, %v391, 0
        %v701 = vsel %vm597, %v392, 0
        %v704 = vsel %vm597, %v393, 0
        %706 = vmatpush.xpose.msra.mxu0 %v656
        %707 = vmatpush.xpose.msra.mxu0 %v653
        %708 = vmatpush.xpose.msra.mxu0 %v650
        %709 = vmatpush.xpose.msra.mxu0 %v647
        %710 = vmatpush.xpose.msra.mxu0 %v644
        %711 = vmatpush.xpose.msra.mxu0 %v641
        %712 = vmatpush.xpose.msra.mxu0 %v638
        %713 = vmatpush.xpose.msra.mxu0 %v635
        %714 = vmatpush.xpose.msra.mxu0 %v632
        %715 = vmatpush.xpose.msra.mxu0 %v629
        %716 = vmatpush.xpose.msra.mxu0 %v626
        %717 = vmatpush.xpose.msra.mxu0 %v623
        %718 = vmatpush.xpose.msra.mxu0 %v620
        %719 = vmatpush.xpose.msra.mxu0 %v617
        %720 = vmatpush.xpose.msra.mxu0 %v614
        %721 = vmatpush.xpose.msra.mxu0 %v611
        %722 = vmatmul.f32.gmra.mxu0 %v599
        %v723 = vpop.f32.mrf.mxu0
        %v724 = vadd.f32 %v557, %v723
        %725 = vmatmul.f32.gmra.mxu0 %v602
        %v726 = vpop.f32.mrf.mxu0
        %v727 = vadd.f32 %v560, %v726
        %728 = vmatmul.f32.gmra.mxu0 %v605
        %v729 = vpop.f32.mrf.mxu0
        %v730 = vadd.f32 %v563, %v729
        %731 = vmatmul.f32.gmra.mxu0 %v608
        %v732 = vpop.f32.mrf.mxu0
        %v733 = vadd.f32 %v566, %v732
        %734 = vdwg.mxu0
        %735 = vmatpush.xpose.msra.mxu0 %v704
        %736 = vmatpush.xpose.msra.mxu0 %v701
        %737 = vmatpush.xpose.msra.mxu0 %v698
        %738 = vmatpush.xpose.msra.mxu0 %v695
        %739 = vmatpush.xpose.msra.mxu0 %v692
        %740 = vmatpush.xpose.msra.mxu0 %v689
        %741 = vmatpush.xpose.msra.mxu0 %v686
        %742 = vmatpush.xpose.msra.mxu0 %v683
        %743 = vmatpush.xpose.msra.mxu0 %v680
        %744 = vmatpush.xpose.msra.mxu0 %v677
        %745 = vmatpush.xpose.msra.mxu0 %v674
        %746 = vmatpush.xpose.msra.mxu0 %v671
        %747 = vmatpush.xpose.msra.mxu0 %v668
        %748 = vmatpush.xpose.msra.mxu0 %v665
        %749 = vmatpush.xpose.msra.mxu0 %v662
        %750 = vmatpush.xpose.msra.mxu0 %v659
        %751 = vmatmul.f32.gmra.mxu0 %v599
        %v752 = vpop.f32.mrf.mxu0
        %v753 = vadd.f32 %v586, %v752
        %754 = vmatmul.f32.gmra.mxu0 %v602
        %v755 = vpop.f32.mrf.mxu0
        %v756 = vadd.f32 %v589, %v755
        %757 = vmatmul.f32.gmra.mxu0 %v605
        %v758 = vpop.f32.mrf.mxu0
        %v759 = vadd.f32 %v592, %v758
        %760 = vmatmul.f32.gmra.mxu0 %v608
        %v761 = vpop.f32.mrf.mxu0
        %v762 = vadd.f32 %v595, %v761
        %763 = vdwg.mxu0
        %v764 = vld [vmem:[%s4] sm:$0xff]
        %v765 = vld [vmem:[%s4 + $0x8] sm:$0xff]
        %v766 = vld [vmem:[%s4 + $0x10] sm:$0xff]
        %v767 = vld [vmem:[%s4 + $0x18] sm:$0xff]
        %769 = vset.pattern.permute.xlu0 0
        %770 = vperm.xlu0 %769, %v764
        %v771 = vpop.permute.xlu0 %770
        %774 = vset.pattern.permute.xlu0 0
        %775 = vperm.xlu0 %774, %v765
        %v776 = vpop.permute.xlu0 %775
        %779 = vset.pattern.permute.xlu0 0
        %780 = vperm.xlu0 %779, %v766
        %v781 = vpop.permute.xlu0 %780
        %784 = vset.pattern.permute.xlu0 0
        %785 = vperm.xlu0 %784, %v767
        %v786 = vpop.permute.xlu0 %785
        %v788 = vadd.f32 %v724, %v771
        %v789 = vadd.f32 %v753, %v771
        %v790 = vadd.f32 %v727, %v776
        %v791 = vadd.f32 %v756, %v776
        %v792 = vadd.f32 %v730, %v781
        %v793 = vadd.f32 %v759, %v781
        %v794 = vadd.f32 %v733, %v786
        %v795 = vadd.f32 %v762, %v786
        %v796 = vmax.f32 %v788, 0.0
        %v797 = vmax.f32 %v789, 0.0
        %v798 = vmax.f32 %v790, 0.0
        %v799 = vmax.f32 %v791, 0.0
        %v800 = vmax.f32 %v792, 0.0
        %v801 = vmax.f32 %v793, 0.0
        %v802 = vmax.f32 %v794, 0.0
        %v803 = vmax.f32 %v795, 0.0
        %v804 = vld [vmem:[%s5] sm:$0xff]
        %v805 = vld [vmem:[%s5 + $0x8] sm:$0xff]
        %v806 = vld [vmem:[%s5 + $0x10] sm:$0xff]
        %v807 = vld [vmem:[%s5 + $0x18] sm:$0xff]
        %v808 = vld [vmem:[%s6] sm:$0xff]
        %v809 = vld [vmem:[%s6 + $0x8] sm:$0xff]
        %v810 = vld [vmem:[%s6 + $0x10] sm:$0xff]
        %v811 = vld [vmem:[%s6 + $0x18] sm:$0xff]
        %813 = vset.pattern.permute.xlu0 0
        %814 = vperm.xlu0 %813, %v808
        %v815 = vpop.permute.xlu0 %814
        %818 = vset.pattern.permute.xlu0 0
        %819 = vperm.xlu0 %818, %v809
        %v820 = vpop.permute.xlu0 %819
        %823 = vset.pattern.permute.xlu0 0
        %824 = vperm.xlu0 %823, %v810
        %v825 = vpop.permute.xlu0 %824
        %828 = vset.pattern.permute.xlu0 0
        %829 = vperm.xlu0 %828, %v811
        %v830 = vpop.permute.xlu0 %829
        %v833 = vsel %vm597, %v804, 0
        %v836 = vsel %vm597, %v805, 0
        %v839 = vsel %vm597, %v806, 0
        %v842 = vsel %vm597, %v807, 0
        %844 = vmatpush.msra.mxu0 0.0
        %845 = vmatpush.msra.mxu0 0.0
        %846 = vmatpush.msra.mxu0 0.0
        %847 = vmatpush.msra.mxu0 0.0
        %848 = vmatpush.msra.mxu0 0.0
        %849 = vmatpush.msra.mxu0 0.0
        %850 = vmatpush.msra.mxu0 0.0
        %851 = vmatpush.msra.mxu0 0.0
        %852 = vmatpush.msra.mxu0 0.0
        %853 = vmatpush.msra.mxu0 0.0
        %854 = vmatpush.msra.mxu0 0.0
        %855 = vmatpush.msra.mxu0 0.0
        %856 = vmatpush.msra.mxu0 %v802
        %857 = vmatpush.msra.mxu0 %v800
        %858 = vmatpush.msra.mxu0 %v798
        %859 = vmatpush.msra.mxu0 %v796
        %860 = vmatmul.f32.gmra.mxu0 %v833
        %v861 = vpop.f32.mrf.mxu0
        %v862 = vadd.f32 %v815, %v861
        %863 = vmatmul.f32.gmra.mxu0 %v836
        %v864 = vpop.f32.mrf.mxu0
        %v865 = vadd.f32 %v820, %v864
        %866 = vmatmul.f32.gmra.mxu0 %v839
        %v867 = vpop.f32.mrf.mxu0
        %v868 = vadd.f32 %v825, %v867
        %869 = vmatmul.f32.gmra.mxu0 %v842
        %v870 = vpop.f32.mrf.mxu0
        %v871 = vadd.f32 %v830, %v870
        %872 = vdwg.mxu0
        %873 = vmatpush.msra.mxu0 0.0
        %874 = vmatpush.msra.mxu0 0.0
        %875 = vmatpush.msra.mxu0 0.0
        %876 = vmatpush.msra.mxu0 0.0
        %877 = vmatpush.msra.mxu0 0.0
        %878 = vmatpush.msra.mxu0 0.0
        %879 = vmatpush.msra.mxu0 0.0
        %880 = vmatpush.msra.mxu0 0.0
        %881 = vmatpush.msra.mxu0 0.0
        %882 = vmatpush.msra.mxu0 0.0
        %883 = vmatpush.msra.mxu0 0.0
        %884 = vmatpush.msra.mxu0 0.0
        %885 = vmatpush.msra.mxu0 %v803
        %886 = vmatpush.msra.mxu0 %v801
        %887 = vmatpush.msra.mxu0 %v799
        %888 = vmatpush.msra.mxu0 %v797
        %889 = vmatmul.f32.gmra.mxu0 %v833
        %v890 = vpop.f32.mrf.mxu0
        %v891 = vadd.f32 %v815, %v890
        %892 = vmatmul.f32.gmra.mxu0 %v836
        %v893 = vpop.f32.mrf.mxu0
        %v894 = vadd.f32 %v820, %v893
        %895 = vmatmul.f32.gmra.mxu0 %v839
        %v896 = vpop.f32.mrf.mxu0
        %v897 = vadd.f32 %v825, %v896
        %898 = vmatmul.f32.gmra.mxu0 %v842
        %v899 = vpop.f32.mrf.mxu0
        %v900 = vadd.f32 %v830, %v899
        %901 = vdwg.mxu0
        %v902 = vmax.f32 %v862, 0.0
        %v903 = vmax.f32 %v891, 0.0
        %v904 = vmax.f32 %v865, 0.0
        %v905 = vmax.f32 %v894, 0.0
        %v906 = vmax.f32 %v868, 0.0
        %v907 = vmax.f32 %v897, 0.0
        %v908 = vmax.f32 %v871, 0.0
        %v909 = vmax.f32 %v900, 0.0
        %s910 = scalar_lea.vmem %s5, 32
        %v911 = vld [vmem:[%s910] sm:$0xff]
        %v912 = vld [vmem:[%s910 + $0x8] sm:$0xff]
        %v913 = vld [vmem:[%s910 + $0x10] sm:$0xff]
        %v914 = vld [vmem:[%s910 + $0x18] sm:$0xff]
        %s915 = scalar_lea.vmem %s6, 32
        %v916 = vld [vmem:[%s915] sm:$0xff]
        %v917 = vld [vmem:[%s915 + $0x8] sm:$0xff]
        %v918 = vld [vmem:[%s915 + $0x10] sm:$0xff]
        %v919 = vld [vmem:[%s915 + $0x18] sm:$0xff]
        %921 = vset.pattern.permute.xlu0 0
        %922 = vperm.xlu0 %921, %v916
        %v923 = vpop.permute.xlu0 %922
        %926 = vset.pattern.permute.xlu0 0
        %927 = vperm.xlu0 %926, %v917
        %v928 = vpop.permute.xlu0 %927
        %931 = vset.pattern.permute.xlu0 0
        %932 = vperm.xlu0 %931, %v918
        %v933 = vpop.permute.xlu0 %932
        %936 = vset.pattern.permute.xlu0 0
        %937 = vperm.xlu0 %936, %v919
        %v938 = vpop.permute.xlu0 %937
        %v941 = vsel %vm597, %v911, 0
        %v944 = vsel %vm597, %v912, 0
        %v947 = vsel %vm597, %v913, 0
        %v950 = vsel %vm597, %v914, 0
        %952 = vmatpush.msra.mxu0 0.0
        %953 = vmatpush.msra.mxu0 0.0
        %954 = vmatpush.msra.mxu0 0.0
        %955 = vmatpush.msra.mxu0 0.0
        %956 = vmatpush.msra.mxu0 0.0
        %957 = vmatpush.msra.mxu0 0.0
        %958 = vmatpush.msra.mxu0 0.0
        %959 = vmatpush.msra.mxu0 0.0
        %960 = vmatpush.msra.mxu0 0.0
        %961 = vmatpush.msra.mxu0 0.0
        %962 = vmatpush.msra.mxu0 0.0
        %963 = vmatpush.msra.mxu0 0.0
        %964 = vmatpush.msra.mxu0 %v908
        %965 = vmatpush.msra.mxu0 %v906
        %966 = vmatpush.msra.mxu0 %v904
        %967 = vmatpush.msra.mxu0 %v902
        %968 = vmatmul.f32.gmra.mxu0 %v941
        %v969 = vpop.f32.mrf.mxu0
        %v970 = vadd.f32 %v923, %v969
        %971 = vmatmul.f32.gmra.mxu0 %v944
        %v972 = vpop.f32.mrf.mxu0
        %v973 = vadd.f32 %v928, %v972
        %974 = vmatmul.f32.gmra.mxu0 %v947
        %v975 = vpop.f32.mrf.mxu0
        %v976 = vadd.f32 %v933, %v975
        %977 = vmatmul.f32.gmra.mxu0 %v950
        %v978 = vpop.f32.mrf.mxu0
        %v979 = vadd.f32 %v938, %v978
        %980 = vdwg.mxu0
        %981 = vmatpush.msra.mxu0 0.0
        %982 = vmatpush.msra.mxu0 0.0
        %983 = vmatpush.msra.mxu0 0.0
        %984 = vmatpush.msra.mxu0 0.0
        %985 = vmatpush.msra.mxu0 0.0
        %986 = vmatpush.msra.mxu0 0.0
        %987 = vmatpush.msra.mxu0 0.0
        %988 = vmatpush.msra.mxu0 0.0
        %989 = vmatpush.msra.mxu0 0.0
        %990 = vmatpush.msra.mxu0 0.0
        %991 = vmatpush.msra.mxu0 0.0
        %992 = vmatpush.msra.mxu0 0.0
        %993 = vmatpush.msra.mxu0 %v909
        %994 = vmatpush.msra.mxu0 %v907
        %995 = vmatpush.msra.mxu0 %v905
        %996 = vmatpush.msra.mxu0 %v903
        %997 = vmatmul.f32.gmra.mxu0 %v941
        %v998 = vpop.f32.mrf.mxu0
        %v999 = vadd.f32 %v923, %v998
        %1000 = vmatmul.f32.gmra.mxu0 %v944
        %v1001 = vpop.f32.mrf.mxu0
        %v1002 = vadd.f32 %v928, %v1001
        %1003 = vmatmul.f32.gmra.mxu0 %v947
        %v1004 = vpop.f32.mrf.mxu0
        %v1005 = vadd.f32 %v933, %v1004
        %1006 = vmatmul.f32.gmra.mxu0 %v950
        %v1007 = vpop.f32.mrf.mxu0
        %v1008 = vadd.f32 %v938, %v1007
        %1009 = vdwg.mxu0
        %v1010 = vmax.f32 %v970, 0.0
        %v1011 = vmax.f32 %v999, 0.0
        %v1012 = vmax.f32 %v973, 0.0
        %v1013 = vmax.f32 %v1002, 0.0
        %v1014 = vmax.f32 %v976, 0.0
        %v1015 = vmax.f32 %v1005, 0.0
        %v1016 = vmax.f32 %v979, 0.0
        %v1017 = vmax.f32 %v1008, 0.0
        %v1018 = vld [vmem:[%s7] sm:$0x1]
        %v1019 = vld [vmem:[#allocation2] sm:$0x1]
        %1021 = vset.pattern.permute.xlu0 0
        %1022 = vperm.xlu0 %1021, %v1019
        %v1023 = vpop.permute.xlu0 %1022
        %v1025 = vperm.slane %v1023, 0
        %v1027 = vsel %vm597, %v1018, 0
        %1029 = vmatpush.msra.mxu0 0.0
        %1030 = vmatpush.msra.mxu0 0.0
        %1031 = vmatpush.msra.mxu0 0.0
        %1032 = vmatpush.msra.mxu0 0.0
        %1033 = vmatpush.msra.mxu0 0.0
        %1034 = vmatpush.msra.mxu0 0.0
        %1035 = vmatpush.msra.mxu0 0.0
        %1036 = vmatpush.msra.mxu0 0.0
        %1037 = vmatpush.msra.mxu0 0.0
        %1038 = vmatpush.msra.mxu0 0.0
        %1039 = vmatpush.msra.mxu0 0.0
        %1040 = vmatpush.msra.mxu0 0.0
        %1041 = vmatpush.msra.mxu0 %v1016
        %1042 = vmatpush.msra.mxu0 %v1014
        %1043 = vmatpush.msra.mxu0 %v1012
        %1044 = vmatpush.msra.mxu0 %v1010
        %1045 = vmatmul.f32.gmra.mxu0 %v1027
        %v1046 = vpop.f32.mrf.mxu0
        %v1047 = vadd.f32 %v1025, %v1046
        %1048 = vdwg.mxu0
        %1049 = vmatpush.msra.mxu0 0.0
        %1050 = vmatpush.msra.mxu0 0.0
        %1051 = vmatpush.msra.mxu0 0.0
        %1052 = vmatpush.msra.mxu0 0.0
        %1053 = vmatpush.msra.mxu0 0.0
        %1054 = vmatpush.msra.mxu0 0.0
        %1055 = vmatpush.msra.mxu0 0.0
        %1056 = vmatpush.msra.mxu0 0.0
        %1057 = vmatpush.msra.mxu0 0.0
        %1058 = vmatpush.msra.mxu0 0.0
        %1059 = vmatpush.msra.mxu0 0.0
        %1060 = vmatpush.msra.mxu0 0.0
        %1061 = vmatpush.msra.mxu0 %v1017
        %1062 = vmatpush.msra.mxu0 %v1015
        %1063 = vmatpush.msra.mxu0 %v1013
        %1064 = vmatpush.msra.mxu0 %v1011
        %1065 = vmatmul.f32.gmra.mxu0 %v1027
        %v1066 = vpop.f32.mrf.mxu0
        %v1067 = vadd.f32 %v1025, %v1066
        %1068 = vdwg.mxu0
        %v1071 = vrot.slane %v1067, 7
        %vm1072 = vcmask 1040384
        %v1073 = vsel %vm1072, %v1047, %v1071
        %v1075 = vlaneseq
        %vm1076 = vcmp.ge.s32.totalorder %v1075, 0
        %vm1077 = vcmp.lt.s32.totalorder %v1075, 256
        %vm1078 = vmand %vm1076, %vm1077
        %1079 = vst.msk [vmem:[%s344] sm:$0x3] %vm1078, %v1073
        %s1080 = sand.u32 %s232, 1
        %s1081 = scalar_lea.sflag [#allocation4], %s1080
        %s1082 = sand.u32 %s232, 1
        %s1083 = smul.addr %s1082, 2
        %s1084 = scalar_lea.vmem [#allocation3], %s1083
        // Predicated region
        $region57: #{tpu_custom_call.1} parent=55 // pred_check
          %p1085 = pneg %p242
        $region58: #{tpu_custom_call.1} parent=55 // pred_check_branch
          %1087 = sbr.rel (%p1085) target = $region60
        $region59: #{tpu_custom_call.1} parent=55 // pred_region
          %s1088 = smul.u32 2, %s25
          %1090 = vsyncadd %s1081, 0
          %s1091 = scalar_lea.hbm %s9, %s1088
          %s1093 = sshll.u32 %s1084, 4
          %s1094 = int_to_ptr.vmem [resolvable:$true] %s1093
          %s1095 = sshll.u32 %s1091, 4
          %s1096 = int_to_ptr.hbm [resolvable:$true] %s1095
          %1098 = dma.vmem_to_hbm [thread:$0]  %s1094, 32, %s1096, %s1081
        $region60: #{tpu_custom_call.1} parent=55 // pred_fallthru
          _
      $region56: #{tpu_custom_call.1} parent=5 // pred_fallthru
        _
      %p1099 = scmp.le.s32.totalorder 2, %s20
      // Predicated region
      $region61: #{tpu_custom_call.1} parent=5 // pred_check
        %p1100 = pneg %p1099
      $region62: #{tpu_custom_call.1} parent=5 // pred_check_branch
        %1102 = sbr.rel (%p1100) target = $region64
      $region63: #{tpu_custom_call.1} parent=5 // pred_region
        %s1103 = ssub.s32 %s20, 2
        // Predicated region
        $region65: #{tpu_custom_call.1} parent=63 // pred_check
          %p1104 = pneg %p248
        $region66: #{tpu_custom_call.1} parent=63 // pred_check_branch
          %1106 = sbr.rel (%p1104) target = $region68
        $region67: #{tpu_custom_call.1} parent=63 // pred_region
          %s1107 = sand.u32 %s233, 1
          %s1108 = scalar_lea.sflag [#allocation4], %s1107
          %s1109 = sand.u32 %s233, 1
          %s1110 = smul.addr %s1109, 2
          %s1111 = scalar_lea.vmem [#allocation3], %s1110
          %1113 = dma.done %s1108, 32
        $region68: #{tpu_custom_call.1} parent=63 // pred_fallthru
          _
      $region64: #{tpu_custom_call.1} parent=5 // pred_fallthru
        _
    $region6: #{tpu_custom_call.1} parent=1 // loop_footer
      %s24 = sadd.s32 1, %s20
    $region7: #{tpu_custom_call.1} parent=1 // loop_footer_branch
      %19 = sbr.rel target = $region3
    $region8: #{tpu_custom_call.1} parent=1 // loop_exit
      _
    %1114 = vsyncpa [#allocation4], 1
    %s1115 = scalar_lea.sflag [#allocation4], 1
    %1116 = vsyncpa %s1115, 1

</llo_original>
